<compile_context>
chip_gen: v7x
topology: tpu7x:2x2x1
jax: 0.10.0
libtpu: 0.0.40
codegen_flags: <defaults>
</compile_context>

<pallas_src>
import functools

import jax
import jax.numpy as jnp
from jax.experimental import pallas as pl
from jax.experimental.pallas import tpu as pltpu

_LANE = 128


def _round_up(a, b):
    return -(-a // b) * b


def _cutout_kernel(params_ref, x_ref, o_ref, *,
                   num_holes, fill_value, w, hw_total, block_rows):
    """params_ref: SMEM int32 [num_holes*4] = (i*W, (i+dh)*W, j, j+dw) per hole.

    x_ref / o_ref: fully dense VMEM tile (block_rows, 128) of the flattened
    (C*H*W,) image.
    """
    x = x_ref[...]

    base = pl.program_id(0) * (block_rows * _LANE)
    flat = (jax.lax.broadcasted_iota(jnp.int32, (block_rows, _LANE), 0) * _LANE
            + jax.lax.broadcasted_iota(jnp.int32, (block_rows, _LANE), 1)
            + base)
    hw = flat % hw_total      # position inside one (H, W) plane (channel-free)
    col = hw % w              # column; the row test is done on hw directly

    mask = None
    for hole in range(num_holes):          # num_holes is a static Python int
        r_lo = params_ref[4 * hole + 0]    # i * W
        r_hi = params_ref[4 * hole + 1]    # (i + dh_eff) * W
        c_lo = params_ref[4 * hole + 2]    # j
        c_hi = params_ref[4 * hole + 3]    # j + dw_eff
        # row >= i  <=>  hw >= i*W (because col < W), likewise for the upper
        # bound, so no per-element hw // W division is needed.
        m = (hw >= r_lo) & (hw < r_hi) & (col >= c_lo) & (col < c_hi)
        mask = m if mask is None else (mask | m)

    o_ref[...] = jnp.where(mask, jnp.asarray(fill_value, x.dtype), x)


def cutout_pallas(x, hole_params, *, fill_value=0.0):
    """x: (C, H, W); hole_params: int32 (num_holes, 4) = (i, j, dh_eff, dw_eff).

    dh_eff/dw_eff are already 0 if the hole's apply-with-prob-p draw failed.
    """
    c, h, w = x.shape
    hw_total = h * w
    n = c * hw_total
    num_holes = int(hole_params.shape[0])
    if num_holes == 0:
        return x

    # Host-side precompute of flat hole bounds: (i*W, (i+dh)*W, j, j+dw).
    i = hole_params[:, 0]
    j = hole_params[:, 1]
    dh = hole_params[:, 2]
    dw = hole_params[:, 3]
    params = jnp.stack([i * w, (i + dh) * w, j, j + dw], axis=1)
    params = params.reshape(-1).astype(jnp.int32)   # 1-D -> tiny SMEM footprint

    dtype_bytes = jnp.dtype(x.dtype).itemsize
    sublane = 8 * max(1, 4 // dtype_bytes)   # 8 (f32) / 16 (bf16) / 32 (int8)

    rows = -(-n // _LANE)
    # ~1 MiB per block: at/past the HBM-roofline knee, and double-buffered
    # in/out blocks + int32 temporaries stay far below scoped VMEM on all chips.
    max_block_rows = max(sublane,
                         (1 << 20) // (_LANE * dtype_bytes) // sublane * sublane)
    # Cap at half the rows (rounded up to a sublane multiple) so grid >= 2 and
    # the "parallel" axis can be split across the 2 TensorCores on v7x.
    half_rows = max(sublane, _round_up(-(-rows // 2), sublane))
    block_rows = max(sublane, min(max_block_rows, half_rows))

    rows_padded = _round_up(rows, block_rows)
    n_pad = rows_padded * _LANE
    grid = (rows_padded // block_rows,)

    x_flat = x.reshape(-1)
    if n_pad != n:
        # Pad to a whole number of blocks: every store is a full unmasked vst.
        x_flat = jnp.pad(x_flat, (0, n_pad - n))
    x2d = x_flat.reshape(rows_padded, _LANE)

    kernel = functools.partial(
        _cutout_kernel,
        num_holes=num_holes,
        fill_value=fill_value,
        w=w,
        hw_total=hw_total,
        block_rows=block_rows,
    )

    out2d = pl.pallas_call(
        kernel,
        out_shape=jax.ShapeDtypeStruct((rows_padded, _LANE), x.dtype),
        grid_spec=pltpu.PrefetchScalarGridSpec(
            num_scalar_prefetch=1,
            grid=grid,
            in_specs=[pl.BlockSpec((block_rows, _LANE), lambda g, prm: (g, 0))],
            out_specs=pl.BlockSpec((block_rows, _LANE), lambda g, prm: (g, 0)),
        ),
        compiler_params=pltpu.CompilerParams(
            dimension_semantics=("parallel",),
            vmem_limit_bytes=32 * 1024 * 1024,
        ),
    )(params, x2d)

    # TODO(synk): for very large images, alias the input (input_output_aliases)
    # and drive the grid from the hole params so only hole-intersecting tiles
    # are read/masked/written back (~100x less HBM traffic for a 1x8x8 hole);
    # this streaming path remains the correct fallback.
    return out2d.reshape(-1)[:n].reshape(c, h, w)


def make_hole_params(key, *, num_holes, h, w, max_h, max_w, p):
    """Replicates the PyTorch module's random draws with jax.random.

    random.random() < p          -> apply flag (folded into the hole size)
    random.randint(0, h - 1)     -> i in [0, h-1]
    random.randint(0, w - 1)     -> j in [0, w-1]
    random.randint(0, max_h - 1) -> hole height in [0, max_h-1]
    random.randint(0, max_w - 1) -> hole width  in [0, max_w-1]
    """
    rows = []
    for _ in range(num_holes):
        key, k_apply, k_i, k_j, k_dh, k_dw = jax.random.split(key, 6)
        apply = (jax.random.uniform(k_apply, ()) < p).astype(jnp.int32)
        i = jax.random.randint(k_i, (), 0, h, dtype=jnp.int32)
        j = jax.random.randint(k_j, (), 0, w, dtype=jnp.int32)
        dh = jax.random.randint(k_dh, (), 0, max_h, dtype=jnp.int32) * apply
        dw = jax.random.randint(k_dw, (), 0, max_w, dtype=jnp.int32) * apply
        rows.append(jnp.stack([i, j, dh, dw]))
    return jnp.stack(rows).astype(jnp.int32), key


def cutout_ref(x, hole_params, fill_value=0.0):
    """Pure-JAX reference (same semantics as the PyTorch module)."""
    c, h, w = x.shape
    row = jax.lax.broadcasted_iota(jnp.int32, (c, h, w), 1)
    col = jax.lax.broadcasted_iota(jnp.int32, (c, h, w), 2)
    out = x
    for hole in range(hole_params.shape[0]):
        i, j, dh, dw = [hole_params[hole, k] for k in range(4)]
        mask = (row >= i) & (row < i + dh) & (col >= j) & (col < j + dw)
        out = jnp.where(mask, jnp.asarray(fill_value, x.dtype), out)
    return out


if __name__ == "__main__":
    # Module defaults: num_holes=1, max_h=8, max_w=8, fill_value=0, p=0.5
    NUM_HOLES, MAX_H, MAX_W, FILL_VALUE, P = 1, 8, 8, 0.0, 0.5

    key = jax.random.PRNGKey(0)

    # Test 1: module defaults, random draws, (4, 16, 16).
    C, H, W = 4, 16, 16
    key, k_x = jax.random.split(key)
    x = jax.random.normal(k_x, (C, H, W), dtype=jnp.float32)
    hole_params, key = make_hole_params(
        key, num_holes=NUM_HOLES, h=H, w=W, max_h=MAX_H, max_w=MAX_W, p=P
    )
    out = jax.block_until_ready(cutout_pallas(x, hole_params, fill_value=FILL_VALUE))
    assert out.shape == x.shape and out.dtype == x.dtype
    assert jnp.allclose(out, cutout_ref(x, hole_params, FILL_VALUE))

    # Test 2: forced deterministic hole (exercises the mask path for sure).
    forced = jnp.array([[3, 5, 6, 7]], dtype=jnp.int32)
    out2 = jax.block_until_ready(cutout_pallas(x, forced, fill_value=FILL_VALUE))
    assert jnp.allclose(out2, cutout_ref(x, forced, FILL_VALUE))

    # Test 3: non-128-multiple H*W (exercises the padded-tail path).
    C3, H3, W3 = 3, 10, 13
    key, k_x3 = jax.random.split(key)
    x3 = jax.random.normal(k_x3, (C3, H3, W3), dtype=jnp.float32)
    forced3 = jnp.array([[2, 4, 5, 6], [8, 10, 4, 4]], dtype=jnp.int32)
    out3 = jax.block_until_ready(cutout_pallas(x3, forced3, fill_value=FILL_VALUE))
    assert jnp.allclose(out3, cutout_ref(x3, forced3, FILL_VALUE))

    print("KERNEL_OK")
</pallas_src>

<mosaic_0001>
module attributes {stable_mosaic.version = 11 : i64} {
  func.func @_cutout_kernel(%arg0: i32, %arg1: memref<4xi32, #tpu.memory_space<smem>>, %arg2: memref<8x128xf32, #tpu.memory_space<vmem>>, %arg3: memref<8x128xf32, #tpu.memory_space<vmem>>) attributes {dimension_semantics = [#tpu.dimension_semantics<parallel>], iteration_bounds = array<i64: 1>, scalar_prefetch = 1 : i64, scratch_operands = 0 : i64, tpu.core_type = #tpu.core_type<tc>, window_params = [{transform_indices = @transform_0, window_bounds = array<i64: 8, 128>}, {transform_indices = @transform_1, window_bounds = array<i64: 8, 128>}]} {
    %c0 = arith.constant 0 : index
    %c0_0 = arith.constant 0 : index
    %0 = vector.load %arg2[%c0, %c0_0] : memref<8x128xf32, #tpu.memory_space<vmem>>, vector<8x128xf32>
    %c1024_i32 = arith.constant 1024 : i32
    %1 = arith.muli %arg0, %c1024_i32 : i32
    %2 = tpu.iota {dimensions = array<i32: 0>} : vector<8x128xi32>
    %c128_i32 = arith.constant 128 : i32
    %3 = vector.broadcast %c128_i32 : i32 to vector<8x128xi32>
    %4 = arith.muli %2, %3 : vector<8x128xi32>
    %5 = tpu.iota {dimensions = array<i32: 1>} : vector<8x128xi32>
    %6 = arith.addi %4, %5 : vector<8x128xi32>
    %7 = vector.broadcast %1 : i32 to vector<8x128xi32>
    %8 = arith.addi %6, %7 : vector<8x128xi32>
    %c256_i32 = arith.constant 256 : i32
    %c0_i32 = arith.constant 0 : i32
    %9 = arith.cmpi eq, %c256_i32, %c0_i32 : i32
    %c1_i32 = arith.constant 1 : i32
    %10 = arith.select %9, %c1_i32, %c256_i32 : i32
    %11 = vector.broadcast %10 : i32 to vector<8x128xi32>
    %12 = arith.remsi %8, %11 : vector<8x128xi32>
    %c0_i32_1 = arith.constant 0 : i32
    %13 = vector.broadcast %c0_i32_1 : i32 to vector<8x128xi32>
    %14 = arith.cmpi ne, %12, %13 : vector<8x128xi32>
    %c0_i32_2 = arith.constant 0 : i32
    %15 = vector.broadcast %c0_i32_2 : i32 to vector<8x128xi32>
    %16 = arith.cmpi slt, %12, %15 : vector<8x128xi32>
    %c0_i32_3 = arith.constant 0 : i32
    %17 = arith.cmpi slt, %10, %c0_i32_3 : i32
    %18 = vector.broadcast %17 : i1 to vector<8x128xi1>
    %19 = vector.broadcast %18 : vector<8x128xi1> to vector<8x128xi1>
    %20 = arith.xori %16, %19 : vector<8x128xi1>
    %21 = arith.andi %20, %14 : vector<8x128xi1>
    %22 = vector.broadcast %10 : i32 to vector<8x128xi32>
    %23 = arith.addi %12, %22 : vector<8x128xi32>
    %24 = arith.select %21, %23, %12 : vector<8x128xi1>, vector<8x128xi32>
    %c16_i32 = arith.constant 16 : i32
    %c0_i32_4 = arith.constant 0 : i32
    %25 = arith.cmpi eq, %c16_i32, %c0_i32_4 : i32
    %c1_i32_5 = arith.constant 1 : i32
    %26 = arith.select %25, %c1_i32_5, %c16_i32 : i32
    %27 = vector.broadcast %26 : i32 to vector<8x128xi32>
    %28 = arith.remsi %24, %27 : vector<8x128xi32>
    %c0_i32_6 = arith.constant 0 : i32
    %29 = vector.broadcast %c0_i32_6 : i32 to vector<8x128xi32>
    %30 = arith.cmpi ne, %28, %29 : vector<8x128xi32>
    %c0_i32_7 = arith.constant 0 : i32
    %31 = vector.broadcast %c0_i32_7 : i32 to vector<8x128xi32>
    %32 = arith.cmpi slt, %28, %31 : vector<8x128xi32>
    %c0_i32_8 = arith.constant 0 : i32
    %33 = arith.cmpi slt, %26, %c0_i32_8 : i32
    %34 = vector.broadcast %33 : i1 to vector<8x128xi1>
    %35 = vector.broadcast %34 : vector<8x128xi1> to vector<8x128xi1>
    %36 = arith.xori %32, %35 : vector<8x128xi1>
    %37 = arith.andi %36, %30 : vector<8x128xi1>
    %38 = vector.broadcast %26 : i32 to vector<8x128xi32>
    %39 = arith.addi %28, %38 : vector<8x128xi32>
    %40 = arith.select %37, %39, %28 : vector<8x128xi1>, vector<8x128xi32>
    %c0_9 = arith.constant 0 : index
    %41 = memref.load %arg1[%c0_9] : memref<4xi32, #tpu.memory_space<smem>>
    %c1 = arith.constant 1 : index
    %42 = memref.load %arg1[%c1] : memref<4xi32, #tpu.memory_space<smem>>
    %c2 = arith.constant 2 : index
    %43 = memref.load %arg1[%c2] : memref<4xi32, #tpu.memory_space<smem>>
    %c3 = arith.constant 3 : index
    %44 = memref.load %arg1[%c3] : memref<4xi32, #tpu.memory_space<smem>>
    %45 = vector.broadcast %41 : i32 to vector<8x128xi32>
    %46 = arith.cmpi sge, %24, %45 : vector<8x128xi32>
    %47 = vector.broadcast %42 : i32 to vector<8x128xi32>
    %48 = arith.cmpi slt, %24, %47 : vector<8x128xi32>
    %49 = arith.andi %46, %48 : vector<8x128xi1>
    %50 = vector.broadcast %43 : i32 to vector<8x128xi32>
    %51 = arith.cmpi sge, %40, %50 : vector<8x128xi32>
    %52 = arith.andi %49, %51 : vector<8x128xi1>
    %53 = vector.broadcast %44 : i32 to vector<8x128xi32>
    %54 = arith.cmpi slt, %40, %53 : vector<8x128xi32>
    %55 = arith.andi %52, %54 : vector<8x128xi1>
    %cst = arith.constant 0.000000e+00 : f32
    %56 = vector.broadcast %cst : f32 to vector<8x128xf32>
    %57 = arith.select %55, %56, %0 : vector<8x128xi1>, vector<8x128xf32>
    %c0_10 = arith.constant 0 : index
    %c0_11 = arith.constant 0 : index
    %58 = vector.load %arg3[%c0_10, %c0_11] : memref<8x128xf32, #tpu.memory_space<vmem>>, vector<8x128xf32>
    tpu.vector_store %arg3[%c0_10, %c0_11], %57 {strides = array<i32>} : memref<8x128xf32, #tpu.memory_space<vmem>>, vector<8x128xf32>,
    return
  }
  func.func @transform_0(%arg0: i32, %arg1: memref<4xi32, #tpu.memory_space<smem>>) -> (i32, i32) {
    %c0_i32 = arith.constant 0 : i32
    %c0_i32_0 = arith.constant 0 : i32
    return %arg0, %c0_i32 : i32, i32
  }
  func.func @transform_1(%arg0: i32, %arg1: memref<4xi32, #tpu.memory_space<smem>>) -> (i32, i32) {
    %c0_i32 = arith.constant 0 : i32
    %c0_i32_0 = arith.constant 0 : i32
    return %arg0, %c0_i32 : i32, i32
  }
}

</mosaic_0001>

<llo_original>
// kernel: tpu_custom_call.1
$region0: #{tpu_custom_call.1}
  #allocation0 [shape = 'u32[]', space=smem, size = 0x4, offset = 0x4, fixed_abs, tag = 'smem constant byte address 0x4 - core index']
  #allocation1 [shape = 'u32[144,128]{1,0:T(1,128)}', space=vmem, size = 0x12000, scoped, tag = 'internal scratch']
  #allocation2 [shape = 's32[1]{0}', space=sflag, size = 0x4, scoped, tag = 'scoped memory for tpu_custom_call.1']
  #allocation3 [shape = 'u8[512]{0}', space=smem, size = 0x200, scoped, tag = 'prefetched SMEM operand 0']
  %s0 = inlined_call_operand.hbm [shape: s32[4], index: 0, kind: input, shape index: {}]
  %s1 = inlined_call_operand.hbm [shape: f32[8,128], index: 1, kind: input, shape index: {}]
  %s2 = inlined_call_operand.hbm [shape: f32[8,128], index: 2, kind: output, shape index: {}]
  %s3 = sld [smem:[#allocation0]]
  $region18: #{tpu_custom_call.1} parent=0
    _
  %s5 = ssub.s32 1, %s3
  %s6 = scalar_select 0, %s5, %s3
  %8 = dma.hbm_to_smem %s0, 16, [#allocation3], [#allocation2]
  %9 = dma.done [#allocation2], 16
  %10 = sfence
  $region1: #{tpu_custom_call.1} parent=0
    #allocation4 [shape = 'u8[4096]{0}', space=vmem, size = 0x1000, scoped, tag = 'input window, operand 1, single buffered']
    #allocation5 [shape = 's32[1]{0}', space=sflag, size = 0x4, scoped, tag = 'scoped memory for tpu_custom_call.1']
    #allocation6 [shape = 's32[1]{0}', space=sflag, size = 0x4, scoped, tag = 'scoped memory for tpu_custom_call.1']
    #allocation7 [shape = 'u8[4096]{0}', space=vmem, size = 0x1000, scoped, tag = 'output window, operand 0, single buffered']
    %11 = vsyncpa [#allocation5], 0
    %12 = vsyncpa [#allocation6], 0
    // Predicated region
    $region2: #{tpu_custom_call.1} parent=1 // pred_check
      _
    $region3: #{tpu_custom_call.1} parent=1 // pred_check_branch
      %14 = sbr.rel (0) target = $region5
    $region4: #{tpu_custom_call.1} parent=1 // pred_region
      %s16 = ssub.s32 128, 128
      %17 = vsyncadd [#allocation5], %s16
      %s19 = sshll.u32 [#allocation4], 4
      %s20 = int_to_ptr.vmem [resolvable:$true] %s19
      %22 = dma.hbm_to_vmem [thread:$0]  %s1, 128, %s20, [#allocation5]
    $region5: #{tpu_custom_call.1} parent=1 // pred_fallthru
      _
    // Predicated region
    $region6: #{tpu_custom_call.1} parent=1 // pred_check
      _
    $region7: #{tpu_custom_call.1} parent=1 // pred_check_branch
      %24 = sbr.rel (0) target = $region9
    $region8: #{tpu_custom_call.1} parent=1 // pred_region
      %25 = dma.done [#allocation5], 128
    $region9: #{tpu_custom_call.1} parent=1 // pred_fallthru
      _
    %v26 = vld [vmem:[#allocation4] sm:$0xff]
    %s27 = smul.u32 0, 1024
    %v28 = vlaneseq
    %v29 = vshrl.u32 %v28, 7
    %v30 = vmul.u32 %v29, 128
    %v31 = vlaneseq
    %v32 = vand.u32 %v31, 127
    %v33 = vadd.s32 %v30, %v32
    %v34 = vstv %s27
    %v35 = vadd.s32 %v33, %v34
    %vm36 = vcmp.lt.s32.totalorder %v35, 0
    %v37 = vsub.s32 0, %v35
    %v38 = vsel %vm36, %v37, %v35
    %v39 = vshrl.u32 %v38, 8
    %v40 = vand.u32 %v38, 255
    %v41 = vsub.s32 0, %v40
    %v42 = vsel %vm36, %v41, %v40
    %vm43 = vcmp.ne.s32.totalorder %v42, 0
    %vm44 = vcmp.lt.s32.totalorder %v42, 0
    %vm45 = vmand %vm44, %vm43
    %v46 = vadd.s32 %v42, 256
    %v47 = vsel %vm45, %v46, %v42
    %vm48 = vcmp.lt.s32.totalorder %v47, 0
    %v49 = vsub.s32 0, %v47
    %v50 = vsel %vm48, %v49, %v47
    %v51 = vshrl.u32 %v50, 4
    %v52 = vand.u32 %v50, 15
    %v53 = vsub.s32 0, %v52
    %v54 = vsel %vm48, %v53, %v52
    %vm55 = vcmp.ne.s32.totalorder %v54, 0
    %vm56 = vcmp.lt.s32.totalorder %v54, 0
    %vm57 = vmand %vm56, %vm55
    %v58 = vadd.s32 %v54, 16
    %v59 = vsel %vm57, %v58, %v54
    %s60 = sld [smem:[#allocation3]]
    %s61 = sld [smem:[#allocation3 + $0x1]]
    %s62 = sld [smem:[#allocation3 + $0x2]]
    %s63 = sld [smem:[#allocation3 + $0x3]]
    %v64 = vstv %s60
    %vm65 = vcmp.ge.s32.totalorder %v47, %v64
    %v66 = vstv %s61
    %vm67 = vcmp.lt.s32.totalorder %v47, %v66
    %vm68 = vmand %vm65, %vm67
    %v69 = vstv %s62
    %vm70 = vcmp.ge.s32.totalorder %v59, %v69
    %vm71 = vmand %vm68, %vm70
    %v72 = vstv %s63
    %vm73 = vcmp.lt.s32.totalorder %v59, %v72
    %vm74 = vmand %vm71, %vm73
    %v75 = vsel %vm74, 0.0, %v26
    %76 = vst [vmem:[#allocation7] sm:$0xff] %v75
    // Predicated region
    $region10: #{tpu_custom_call.1} parent=1 // pred_check
      _
    $region11: #{tpu_custom_call.1} parent=1 // pred_check_branch
      %78 = sbr.rel (0) target = $region13
    $region12: #{tpu_custom_call.1} parent=1 // pred_region
      %s80 = ssub.s32 128, 128
      %81 = vsyncadd [#allocation6], %s80
      %s83 = sshll.u32 [#allocation7], 4
      %s84 = int_to_ptr.vmem [resolvable:$true] %s83
      %86 = dma.vmem_to_hbm [thread:$0]  %s84, 128, %s2, [#allocation6]
    $region13: #{tpu_custom_call.1} parent=1 // pred_fallthru
      _
    // Predicated region
    $region14: #{tpu_custom_call.1} parent=1 // pred_check
      _
    $region15: #{tpu_custom_call.1} parent=1 // pred_check_branch
      %88 = sbr.rel (0) target = $region17
    $region16: #{tpu_custom_call.1} parent=1 // pred_region
      %89 = dma.done [#allocation6], 128
    $region17: #{tpu_custom_call.1} parent=1 // pred_fallthru
      _
    %90 = vsyncpa [#allocation5], 1
    %91 = vsyncpa [#allocation6], 1

</llo_original>
